<compile_context>
chip_gen: v7x
topology: tpu7x:2x2x1
jax: 0.10.0
libtpu: 0.0.40
codegen_flags: <defaults>
</compile_context>

<pallas_src>
import jax
import jax.numpy as jnp
from jax import lax
from jax.experimental import pallas as pl
from jax.experimental.pallas import tpu as pltpu

_EPS = 1e-12  # matches torch.nn.functional.normalize default eps


# --------------------------------------------------------------------------- #
# VMEM sizing helpers                                                          #
# --------------------------------------------------------------------------- #
def _vmem_limit_bytes():
    """Scoped-VMEM limit derived from the chip (v5e/v6e: 128 MiB phys -> 96 MiB,
    v7x: 64 MiB phys -> 48 MiB).  Falls back conservatively if the query fails."""
    cap = 64 * 1024 * 1024
    try:
        info = pltpu.get_tpu_info()
        cap = int(getattr(info, "vmem_capacity_bytes", cap)) or cap
    except Exception:
        pass
    return max(32 * 1024 * 1024, min((cap * 3) // 4, 96 * 1024 * 1024))


def _pick_tile_n(npad, c, itemsize, per_buffer_budget):
    """Largest lane-dense (multiple-of-128) N tile dividing npad whose (C,tn)
    buffer fits in per_buffer_budget bytes."""
    cap = max(128, (per_buffer_budget // max(c * itemsize, 1)) // 128 * 128)
    tn = max(128, (min(npad, cap) // 128) * 128)
    while npad % tn != 0:
        tn -= 128
    return tn


def _two_pass_tiles(npad, c, x_itemsize, m_itemsize, limit):
    """Independent tile choices for the gram pass and the apply pass."""
    usable = int(limit * 0.8)
    # Pass 1 live set: 2x (C,tn) x-tile + (C,C) f32 accumulator + temps + 2x (C,C) M out.
    fixed1 = 4 * c * c * 4 + 2 * c * c * m_itemsize
    per_buf1 = max((usable - fixed1) // 2, 128 * c * x_itemsize)
    tn1 = _pick_tile_n(npad, c, x_itemsize, per_buf1)
    # Pass 2 live set: 2x (C,C) M + 2x (C,tn) x-tile + 2x (C,tn) out-tile.
    fixed2 = 2 * c * c * m_itemsize
    per_buf2 = max((usable - fixed2) // 4, 128 * c * x_itemsize)
    tn2 = _pick_tile_n(npad, c, x_itemsize, per_buf2)
    return tn1, tn2


# --------------------------------------------------------------------------- #
# Shared epilogue: build the folded (C,C) mixing matrix M from the gram G      #
# --------------------------------------------------------------------------- #
def _build_mix_matrix(g, qkv_r, qkv_c, wconv):
    """g: (C,C) f32 gram.  Returns M = Wconv @ (softmax(scaled G) * w2_row), f32."""
    c = g.shape[0]
    w0c = qkv_c[:, 0:1].astype(jnp.float32)            # (C, 1)
    w1r = qkv_r[1:2, :].astype(jnp.float32)            # (1, C)
    w2r = qkv_r[2:3, :].astype(jnp.float32)            # (1, C)

    # ||x_i|| = sqrt(G_ii): extract the diagonal with one mask, reduce twice (tiny,
    # runs once per batch).
    rows = lax.broadcasted_iota(jnp.int32, (c, c), 0)
    cols = lax.broadcasted_iota(jnp.int32, (c, c), 1)
    gd = jnp.where(rows == cols, g, 0.0)
    xn_c = jnp.sqrt(jnp.sum(gd, axis=1, keepdims=True))   # (C, 1)
    xn_r = jnp.sqrt(jnp.sum(gd, axis=0, keepdims=True))   # (1, C)

    eps = jnp.float32(_EPS)
    qd = jnp.maximum(jnp.abs(w0c) * xn_c, eps)             # max(||q_i||, eps)
    kd = jnp.maximum(jnp.abs(w1r) * xn_r, eps)             # max(||k_j||, eps)

    scores = g * ((w0c * w1r) / (qd * kd))                  # (C, C)
    scores = scores - jnp.max(scores, axis=-1, keepdims=True)
    p = jnp.exp(scores)
    # Exact divide (not approx reciprocal) to hold 1e-5 tolerance; once per batch.
    p = p / jnp.sum(p, axis=-1, keepdims=True)

    # Fold the v-scale and the 1x1 conv:  M = Wconv @ (p * w2_row)
    return jnp.dot(wconv.astype(jnp.float32), p * w2r,
                   preferred_element_type=jnp.float32)


# --------------------------------------------------------------------------- #
# Fused kernel: one HBM read of x, one write of out, per batch element         #
# --------------------------------------------------------------------------- #
def _fused_kernel(x_ref, qkv_r_ref, qkv_c_ref, wconv_ref, o_ref):
    x = x_ref[0]                                            # (C, Npad), native layout
    # Gram contracting the lane (N) axis of BOTH operands: no transpose materialized.
    g = lax.dot_general(x, x, (((1,), (1,)), ((), ())),
                        preferred_element_type=jnp.float32)
    m = _build_mix_matrix(g, qkv_r_ref[...], qkv_c_ref[...], wconv_ref[...])
    # Same-dtype operand pair for the MXU; accumulate in f32.
    o_ref[0] = jnp.dot(m.astype(x.dtype), x,
                       preferred_element_type=jnp.float32).astype(o_ref.dtype)


# --------------------------------------------------------------------------- #
# Split-path kernels (large per-batch x)                                       #
# --------------------------------------------------------------------------- #
def _attn_matrix_kernel(x_ref, qkv_r_ref, qkv_c_ref, wconv_ref, m_ref, g_acc):
    """Pass 1: accumulate G = x @ x^T over N tiles; build M on the last tile."""
    j = pl.program_id(1)

    @pl.when(j == 0)
    def _():
        g_acc[...] = jnp.zeros_like(g_acc)

    x = x_ref[0]                                            # (C, tn)
    g_acc[...] += lax.dot_general(x, x, (((1,), (1,)), ((), ())),
                                  preferred_element_type=jnp.float32)

    @pl.when(j == pl.num_programs(1) - 1)
    def _():
        m = _build_mix_matrix(g_acc[...], qkv_r_ref[...], qkv_c_ref[...],
                              wconv_ref[...])
        m_ref[0] = m.astype(m_ref.dtype)


def _apply_kernel(m_ref, x_ref, o_ref):
    """Pass 2: out_tile = M @ x_tile (single (C,C)@(C,tn) MXU matmul per tile)."""
    o_ref[0] = jnp.dot(m_ref[0], x_ref[0],
                       preferred_element_type=jnp.float32).astype(o_ref.dtype)


# --------------------------------------------------------------------------- #
# Wrapper                                                                      #
# --------------------------------------------------------------------------- #
def self_attention_pallas(x, qkv_w, conv_w, *, force_two_pass=False):
    """x: (B, C, H, W); qkv_w: (3, C, 1); conv_w: (C, C) (1x1 conv weight, no bias)."""
    B, C, H, W = x.shape
    N = H * W
    x_flat = x.reshape(B, C, N)

    # Zero-pad N to a multiple of 128 (zero columns change neither G, the norms,
    # nor the cropped output) so every block is lane-dense and tileable.
    Npad = ((N + 127) // 128) * 128
    if Npad != N:
        x_flat = jnp.pad(x_flat, ((0, 0), (0, 0), (0, Npad - N)))

    qkv_r = qkv_w.reshape(3, C)         # lane-dense rows (w0,w1,w2)
    qkv_c = jnp.transpose(qkv_r)        # (C, 3) columns (avoids in-kernel transposes)

    itemsize = x.dtype.itemsize
    limit = _vmem_limit_bytes()
    per_batch = C * Npad * itemsize
    # Fused working set: 2x in + 2x out (C,Npad) buffers + a few (C,C) f32 temps.
    fuse = (not force_two_pass) and (4 * per_batch + 8 * C * C * 4) <= int(limit * 0.75)

    if fuse:
        out_flat = pl.pallas_call(
            _fused_kernel,
            out_shape=jax.ShapeDtypeStruct((B, C, Npad), x.dtype),
            grid_spec=pltpu.PrefetchScalarGridSpec(
                num_scalar_prefetch=0,
                grid=(B,),
                in_specs=[
                    pl.BlockSpec((1, C, Npad), lambda b: (b, 0, 0)),
                    pl.BlockSpec((3, C), lambda b: (0, 0)),
                    pl.BlockSpec((C, 3), lambda b: (0, 0)),
                    pl.BlockSpec((C, C), lambda b: (0, 0)),
                ],
                out_specs=pl.BlockSpec((1, C, Npad), lambda b: (b, 0, 0)),
            ),
            compiler_params=pltpu.CompilerParams(
                dimension_semantics=("parallel",),
                vmem_limit_bytes=limit,
            ),
        )(x_flat, qkv_r, qkv_c, conv_w)
    else:
        tn1, tn2 = _two_pass_tiles(Npad, C, itemsize, itemsize, limit)

        # Pass 1: per-image (C,C) mixing matrix M (emitted in x.dtype, f32 accum).
        # Note: with B==1 on v7x this pass runs on a single TensorCore (j is a
        # reduction axis); acceptable since the fused path covers small x.
        m = pl.pallas_call(
            _attn_matrix_kernel,
            out_shape=jax.ShapeDtypeStruct((B, C, C), x.dtype),
            grid_spec=pltpu.PrefetchScalarGridSpec(
                num_scalar_prefetch=0,
                grid=(B, Npad // tn1),
                in_specs=[
                    pl.BlockSpec((1, C, tn1), lambda b, j: (b, 0, j)),
                    pl.BlockSpec((3, C), lambda b, j: (0, 0)),
                    pl.BlockSpec((C, 3), lambda b, j: (0, 0)),
                    pl.BlockSpec((C, C), lambda b, j: (0, 0)),
                ],
                out_specs=pl.BlockSpec((1, C, C), lambda b, j: (b, 0, 0)),
                scratch_shapes=[pltpu.VMEM((C, C), jnp.float32)],
            ),
            compiler_params=pltpu.CompilerParams(
                dimension_semantics=("parallel", "arbitrary"),
                vmem_limit_bytes=limit,
            ),
        )(x_flat, qkv_r, qkv_c, conv_w)

        # Pass 2: out = M @ x, fully parallel over (batch, N tiles).
        out_flat = pl.pallas_call(
            _apply_kernel,
            out_shape=jax.ShapeDtypeStruct((B, C, Npad), x.dtype),
            grid_spec=pltpu.PrefetchScalarGridSpec(
                num_scalar_prefetch=0,
                grid=(B, Npad // tn2),
                in_specs=[
                    pl.BlockSpec((1, C, C), lambda b, j: (b, 0, 0)),
                    pl.BlockSpec((1, C, tn2), lambda b, j: (b, 0, j)),
                ],
                out_specs=pl.BlockSpec((1, C, tn2), lambda b, j: (b, 0, j)),
            ),
            compiler_params=pltpu.CompilerParams(
                dimension_semantics=("parallel", "parallel"),
                vmem_limit_bytes=limit,
            ),
        )(m, x_flat)

    if Npad != N:
        out_flat = out_flat[:, :, :N]
    return out_flat.reshape(B, C, H, W)


# --------------------------------------------------------------------------- #
# Pure-JAX reference (mirrors the PyTorch forward)                             #
# --------------------------------------------------------------------------- #
def self_attention_ref(x, qkv_w, conv_w):
    B, C, H, W = x.shape
    xf = x.reshape(B, C, -1)
    q = xf * qkv_w[0]
    k = xf * qkv_w[1]
    v = xf * qkv_w[2]
    q = q / jnp.maximum(jnp.linalg.norm(q, axis=-1, keepdims=True), _EPS)
    k = k / jnp.maximum(jnp.linalg.norm(k, axis=-1, keepdims=True), _EPS)
    mix = jax.nn.softmax(q @ jnp.swapaxes(k, -1, -2), axis=-1)
    mixed = (mix @ v).reshape(B, C, H, W)
    return jnp.einsum("oc,bchw->bohw", conv_w, mixed)  # 1x1 conv, no bias


if __name__ == "__main__":
    key = jax.random.PRNGKey(0)
    B, C, H, W = 2, 4, 16, 16

    kx, kw = jax.random.split(key)
    x = jax.random.normal(kx, (B, C, H, W), dtype=jnp.float32)

    # Parameters matching the module shapes (qkv_w init = ones, like nn.Parameter).
    qkv_w = jnp.ones((3, C, 1), dtype=jnp.float32)
    conv_w = (jax.random.normal(kw, (C, C), dtype=jnp.float32)
              / jnp.sqrt(jnp.float32(C)))

    ref = self_attention_ref(x, qkv_w, conv_w)

    # Fused (single-read) path — the one chosen automatically at these shapes.
    out_fused = jax.block_until_ready(self_attention_pallas(x, qkv_w, conv_w))
    assert out_fused.shape == (B, C, H, W)
    assert jnp.allclose(out_fused, ref, atol=1e-5, rtol=1e-5), "fused path mismatch"

    # Also exercise the streamed two-pass path used for large per-batch x.
    out_split = jax.block_until_ready(
        self_attention_pallas(x, qkv_w, conv_w, force_two_pass=True))
    assert out_split.shape == (B, C, H, W)
    assert jnp.allclose(out_split, ref, atol=1e-5, rtol=1e-5), "split path mismatch"

    print("KERNEL_OK")
</pallas_src>

<mosaic_0001>
module attributes {stable_mosaic.version = 11 : i64} {
  func.func @_fused_kernel(%arg0: i32, %arg1: memref<1x4x256xf32, #tpu.memory_space<vmem>>, %arg2: memref<3x4xf32, #tpu.memory_space<vmem>>, %arg3: memref<4x3xf32, #tpu.memory_space<vmem>>, %arg4: memref<4x4xf32, #tpu.memory_space<vmem>>, %arg5: memref<1x4x256xf32, #tpu.memory_space<vmem>>) attributes {dimension_semantics = [#tpu.dimension_semantics<parallel>], iteration_bounds = array<i64: 2>, scalar_prefetch = 0 : i64, scratch_operands = 0 : i64, tpu.core_type = #tpu.core_type<tc>, window_params = [{transform_indices = @transform_0, window_bounds = array<i64: 1, 4, 256>}, {pipeline_mode = #tpu.pipeline_mode<synchronous>, transform_indices = @transform_1, window_bounds = array<i64: 3, 4>}, {pipeline_mode = #tpu.pipeline_mode<synchronous>, transform_indices = @transform_2, window_bounds = array<i64: 4, 3>}, {pipeline_mode = #tpu.pipeline_mode<synchronous>, transform_indices = @transform_3, window_bounds = array<i64: 4, 4>}, {transform_indices = @transform_4, window_bounds = array<i64: 1, 4, 256>}]} {
    %c0 = arith.constant 0 : index
    %c0_0 = arith.constant 0 : index
    %c0_1 = arith.constant 0 : index
    %0 = vector.load %arg1[%c0, %c0_0, %c0_1] : memref<1x4x256xf32, #tpu.memory_space<vmem>>, vector<1x4x256xf32>
    %1 = vector.shape_cast %0 : vector<1x4x256xf32> to vector<4x256xf32>
    %cst = arith.constant dense<0.000000e+00> : vector<4x4xf32>
    %2 = tpu.matmul %1, %1, %cst {dimension_numbers = #tpu.dot_dimension_numbers<[1], [1], [0], [0], [0, 0, 1, 0], [], []>} : vector<4x256xf32>, vector<4x256xf32>, vector<4x4xf32> -> vector<4x4xf32>
    %c0_2 = arith.constant 0 : index
    %c0_3 = arith.constant 0 : index
    %3 = vector.load %arg2[%c0_2, %c0_3] : memref<3x4xf32, #tpu.memory_space<vmem>>, vector<3x4xf32>
    %c0_4 = arith.constant 0 : index
    %c0_5 = arith.constant 0 : index
    %4 = vector.load %arg3[%c0_4, %c0_5] : memref<4x3xf32, #tpu.memory_space<vmem>>, vector<4x3xf32>
    %c0_6 = arith.constant 0 : index
    %c0_7 = arith.constant 0 : index
    %5 = vector.load %arg4[%c0_6, %c0_7] : memref<4x4xf32, #tpu.memory_space<vmem>>, vector<4x4xf32>
    %6 = vector.extract_strided_slice %4 {offsets = [0, 0], sizes = [4, 1], strides = [1, 1]} : vector<4x3xf32> to vector<4x1xf32>
    %7 = vector.extract_strided_slice %3 {offsets = [1, 0], sizes = [1, 4], strides = [1, 1]} : vector<3x4xf32> to vector<1x4xf32>
    %8 = vector.extract_strided_slice %3 {offsets = [2, 0], sizes = [1, 4], strides = [1, 1]} : vector<3x4xf32> to vector<1x4xf32>
    %9 = tpu.iota {dimensions = array<i32: 0>} : vector<4x4xi32>
    %10 = tpu.iota {dimensions = array<i32: 1>} : vector<4x4xi32>
    %11 = arith.cmpi eq, %9, %10 : vector<4x4xi32>
    %cst_8 = arith.constant 0.000000e+00 : f32
    %12 = vector.broadcast %cst_8 : f32 to vector<4x4xf32>
    %13 = arith.select %11, %2, %12 : vector<4x4xi1>, vector<4x4xf32>
    %cst_9 = arith.constant dense<0.000000e+00> : vector<4xf32>
    %14 = vector.multi_reduction <add>, %13, %cst_9 [1] : vector<4x4xf32> to vector<4xf32>
    %15 = vector.shape_cast %14 : vector<4xf32> to vector<4x1xf32>
    %16 = math.sqrt %15 : vector<4x1xf32>
    %cst_10 = arith.constant dense<0.000000e+00> : vector<4xf32>
    %17 = vector.multi_reduction <add>, %13, %cst_10 [0] : vector<4x4xf32> to vector<4xf32>
    %18 = vector.shape_cast %17 : vector<4xf32> to vector<1x4xf32>
    %19 = math.sqrt %18 : vector<1x4xf32>
    %20 = math.absf %6 : vector<4x1xf32>
    %21 = arith.mulf %20, %16 : vector<4x1xf32>
    %cst_11 = arith.constant 9.99999996E-13 : f32
    %22 = vector.broadcast %cst_11 : f32 to vector<4x1xf32>
    %23 = arith.maximumf %21, %22 : vector<4x1xf32>
    %24 = math.absf %7 : vector<1x4xf32>
    %25 = arith.mulf %24, %19 : vector<1x4xf32>
    %cst_12 = arith.constant 9.99999996E-13 : f32
    %26 = vector.broadcast %cst_12 : f32 to vector<1x4xf32>
    %27 = arith.maximumf %25, %26 : vector<1x4xf32>
    %28 = vector.broadcast %6 : vector<4x1xf32> to vector<4x4xf32>
    %29 = vector.broadcast %7 : vector<1x4xf32> to vector<4x4xf32>
    %30 = arith.mulf %28, %29 : vector<4x4xf32>
    %31 = vector.broadcast %23 : vector<4x1xf32> to vector<4x4xf32>
    %32 = vector.broadcast %27 : vector<1x4xf32> to vector<4x4xf32>
    %33 = arith.mulf %31, %32 : vector<4x4xf32>
    %34 = arith.divf %30, %33 : vector<4x4xf32>
    %35 = arith.mulf %2, %34 : vector<4x4xf32>
    %cst_13 = arith.constant dense<0xFF800000> : vector<4xf32>
    %36 = vector.multi_reduction <maximumf>, %35, %cst_13 [1] : vector<4x4xf32> to vector<4xf32>
    %37 = vector.shape_cast %36 : vector<4xf32> to vector<4x1xf32>
    %38 = vector.broadcast %37 : vector<4x1xf32> to vector<4x4xf32>
    %39 = arith.subf %35, %38 : vector<4x4xf32>
    %40 = math.exp %39 : vector<4x4xf32>
    %cst_14 = arith.constant dense<0.000000e+00> : vector<4xf32>
    %41 = vector.multi_reduction <add>, %40, %cst_14 [1] : vector<4x4xf32> to vector<4xf32>
    %42 = vector.shape_cast %41 : vector<4xf32> to vector<4x1xf32>
    %43 = vector.broadcast %42 : vector<4x1xf32> to vector<4x4xf32>
    %44 = arith.divf %40, %43 : vector<4x4xf32>
    %45 = vector.broadcast %8 : vector<1x4xf32> to vector<4x4xf32>
    %46 = arith.mulf %44, %45 : vector<4x4xf32>
    %cst_15 = arith.constant dense<0.000000e+00> : vector<4x4xf32>
    %47 = tpu.matmul %5, %46, %cst_15 {dimension_numbers = #tpu.dot_dimension_numbers<[1], [0], [0], [1], [0, 0, 1, 1], [], []>} : vector<4x4xf32>, vector<4x4xf32>, vector<4x4xf32> -> vector<4x4xf32>
    %cst_16 = arith.constant dense<0.000000e+00> : vector<4x256xf32>
    %48 = tpu.matmul %47, %1, %cst_16 {dimension_numbers = #tpu.dot_dimension_numbers<[1], [0], [0], [1], [0, 0, 1, 1], [], []>} : vector<4x4xf32>, vector<4x256xf32>, vector<4x256xf32> -> vector<4x256xf32>
    %c0_17 = arith.constant 0 : index
    %c0_18 = arith.constant 0 : index
    %c0_19 = arith.constant 0 : index
    %49 = vector.load %arg5[%c0_17, %c0_18, %c0_19] : memref<1x4x256xf32, #tpu.memory_space<vmem>>, vector<1x4x256xf32>
    %50 = vector.shape_cast %49 : vector<1x4x256xf32> to vector<4x256xf32>
    %51 = vector.shape_cast %48 : vector<4x256xf32> to vector<1x4x256xf32>
    tpu.vector_store %arg5[%c0_17, %c0_18, %c0_19], %51 {strides = array<i32>} : memref<1x4x256xf32, #tpu.memory_space<vmem>>, vector<1x4x256xf32>,
    return
  }
  func.func @transform_0(%arg0: i32) -> (i32, i32, i32) {
    %c0_i32 = arith.constant 0 : i32
    %c0_i32_0 = arith.constant 0 : i32
    %c0_i32_1 = arith.constant 0 : i32
    return %arg0, %c0_i32, %c0_i32_0 : i32, i32, i32
  }
  func.func @transform_1(%arg0: i32) -> (i32, i32) {
    %c0_i32 = arith.constant 0 : i32
    %c0_i32_0 = arith.constant 0 : i32
    %c0_i32_1 = arith.constant 0 : i32
    return %c0_i32, %c0_i32_0 : i32, i32
  }
  func.func @transform_2(%arg0: i32) -> (i32, i32) {
    %c0_i32 = arith.constant 0 : i32
    %c0_i32_0 = arith.constant 0 : i32
    %c0_i32_1 = arith.constant 0 : i32
    return %c0_i32, %c0_i32_0 : i32, i32
  }
  func.func @transform_3(%arg0: i32) -> (i32, i32) {
    %c0_i32 = arith.constant 0 : i32
    %c0_i32_0 = arith.constant 0 : i32
    %c0_i32_1 = arith.constant 0 : i32
    return %c0_i32, %c0_i32_0 : i32, i32
  }
  func.func @transform_4(%arg0: i32) -> (i32, i32, i32) {
    %c0_i32 = arith.constant 0 : i32
    %c0_i32_0 = arith.constant 0 : i32
    %c0_i32_1 = arith.constant 0 : i32
    return %arg0, %c0_i32, %c0_i32_0 : i32, i32, i32
  }
}

</mosaic_0001>

<llo_original>
// kernel: tpu_custom_call.1
$region0: #{tpu_custom_call.1}
  #allocation0 [shape = 'u32[]', space=smem, size = 0x4, offset = 0x4, fixed_abs, tag = 'smem constant byte address 0x4 - core index']
  #allocation1 [shape = 'u32[144,128]{1,0:T(1,128)}', space=vmem, size = 0x12000, scoped, tag = 'internal scratch']
  %s0 = inlined_call_operand.hbm [shape: f32[2,4,256], index: 0, kind: input, shape index: {}]
  %s1 = inlined_call_operand.hbm [shape: f32[3,4], index: 1, kind: input, shape index: {}]
  %s2 = inlined_call_operand.vmem [shape: f32[4,3], index: 2, kind: input, shape index: {}]
  %s3 = inlined_call_operand.vmem [shape: f32[4,4], index: 3, kind: input, shape index: {}]
  %s4 = inlined_call_operand.hbm [shape: f32[2,4,256], index: 4, kind: output, shape index: {}]
  %s5 = sld [smem:[#allocation0]]
  $region57: #{tpu_custom_call.1} parent=0
    _
  %s7 = ssub.s32 1, %s5
  %s8 = scalar_select 0, %s7, %s5
  $region1: #{tpu_custom_call.1} parent=0
    #allocation2 [shape = 'u8[8192]{0}', space=vmem, size = 0x2000, scoped, tag = 'input window, operand 0']
    #allocation3 [shape = 's32[2]{0}', space=sflag, size = 0x8, scoped, tag = 'scoped memory for tpu_custom_call.1']
    #allocation4 [shape = 's32[2]{0}', space=sflag, size = 0x8, scoped, tag = 'scoped memory for tpu_custom_call.1']
    #allocation5 [shape = 'u8[2048]{0}', space=vmem, size = 0x800, scoped, tag = 'input window, operand 1, single buffered']
    #allocation6 [shape = 's32[1]{0}', space=sflag, size = 0x4, scoped, tag = 'scoped memory for tpu_custom_call.1']
    #allocation7 [shape = 'u8[8192]{0}', space=vmem, size = 0x2000, scoped, tag = 'output window, operand 0']
    %9 = vsyncpa [#allocation3], 0
    %s10 = scalar_lea.sflag [#allocation3], 1
    %11 = vsyncpa %s10, 0
    %12 = vsyncpa [#allocation6], 0
    %13 = vsyncpa [#allocation4], 0
    %s14 = scalar_lea.sflag [#allocation4], 1
    %15 = vsyncpa %s14, 0
    loop: start=0, step=1, limit=4
    $region2: #{tpu_custom_call.1} parent=1 // loop_pre_header
      _
    $region3: #{tpu_custom_call.1} parent=1 // loop_header
      %s17 = sphi 0, %s21
      %p18 = scmp.ge.s32.totalorder %s17, 4
      %s27 = sphi 0, %s29
      %s30 = sphi 0, %s27
      %s31 = sphi 0, %s30
      %s47 = sphi 0, %s31
      %s51 = sphi 0, %s51
      %s53 = sphi 0, %s51
      %s54 = sphi 0, %s53
      %s68 = sphi 0, %s54
      %s72 = sphi 0, %s72
      %s74 = sphi 0, %s72
      %s75 = sphi 0, %s74
      %s89 = sphi 0, %s75
      %s93 = sphi 0, %s93
      %s95 = sphi 0, %s93
      %s96 = sphi 0, %s95
      %s110 = sphi 0, %s96
      %s116 = sphi 0, %s118
      %s119 = sphi 0, %s116
      %s120 = sphi 0, %s119
      %s136 = sphi 0, %s120
    $region4: #{tpu_custom_call.1} parent=1 // loop_header_branch
      %20 = sbr.rel (%p18) target = $region8
    $region5: #{tpu_custom_call.1} parent=1 // loop_body
      %s22 = ssub.s32 %s17, 1
      %s23 = ssub.s32 %s17, 2
      %s24 = sadd.s32 %s17, 1
      %s25 = ssub.s32 %s17, %s24
      %p26 = scmp.eq.s32.totalorder %s25, 0
      %s28 = sadd.s32 %s27, 1
      %s29 = scalar_select %p26, %s27, %s28
      %p32 = pneg %p26
      %p33 = scmp.eq.s32.totalorder %s17, 1
      %p34 = por %p32, %p33
      %p35 = scmp.ne.s32.totalorder %s27, %s30
      %p36 = scmp.eq.s32.totalorder %s17, 0
      %p37 = por %p35, %p36
      %p38 = scmp.ne.s32.totalorder %s27, %s30
      %p39 = scmp.eq.s32.totalorder %s22, 1
      %p40 = por %p38, %p39
      %p41 = scmp.ne.s32.totalorder %s30, %s31
      %p42 = scmp.eq.s32.totalorder %s22, 0
      %p43 = por %p41, %p42
      %p44 = scmp.ne.s32.totalorder %s30, %s31
      %p45 = scmp.eq.s32.totalorder %s23, 1
      %p46 = por %p44, %p45
      %p48 = scmp.ne.s32.totalorder %s31, %s47
      %p49 = scmp.eq.s32.totalorder %s23, 0
      %p50 = por %p48, %p49
      %s52 = sadd.s32 %s51, 1
      %p55 = scmp.eq.s32.totalorder %s17, 1
      %p56 = scmp.ne.s32.totalorder %s51, %s53
      %p57 = scmp.eq.s32.totalorder %s17, 0
      %p58 = por %p56, %p57
      %p59 = scmp.ne.s32.totalorder %s51, %s53
      %p60 = scmp.eq.s32.totalorder %s22, 1
      %p61 = por %p59, %p60
      %p62 = scmp.ne.s32.totalorder %s53, %s54
      %p63 = scmp.eq.s32.totalorder %s22, 0
      %p64 = por %p62, %p63
      %p65 = scmp.ne.s32.totalorder %s53, %s54
      %p66 = scmp.eq.s32.totalorder %s23, 1
      %p67 = por %p65, %p66
      %p69 = scmp.ne.s32.totalorder %s54, %s68
      %p70 = scmp.eq.s32.totalorder %s23, 0
      %p71 = por %p69, %p70
      %s73 = sadd.s32 %s72, 1
      %p76 = scmp.eq.s32.totalorder %s17, 1
      %p77 = scmp.ne.s32.totalorder %s72, %s74
      %p78 = scmp.eq.s32.totalorder %s17, 0
      %p79 = por %p77, %p78
      %p80 = scmp.ne.s32.totalorder %s72, %s74
      %p81 = scmp.eq.s32.totalorder %s22, 1
      %p82 = por %p80, %p81
      %p83 = scmp.ne.s32.totalorder %s74, %s75
      %p84 = scmp.eq.s32.totalorder %s22, 0
      %p85 = por %p83, %p84
      %p86 = scmp.ne.s32.totalorder %s74, %s75
      %p87 = scmp.eq.s32.totalorder %s23, 1
      %p88 = por %p86, %p87
      %p90 = scmp.ne.s32.totalorder %s75, %s89
      %p91 = scmp.eq.s32.totalorder %s23, 0
      %p92 = por %p90, %p91
      %s94 = sadd.s32 %s93, 1
      %p97 = scmp.eq.s32.totalorder %s17, 1
      %p98 = scmp.ne.s32.totalorder %s93, %s95
      %p99 = scmp.eq.s32.totalorder %s17, 0
      %p100 = por %p98, %p99
      %p101 = scmp.ne.s32.totalorder %s93, %s95
      %p102 = scmp.eq.s32.totalorder %s22, 1
      %p103 = por %p101, %p102
      %p104 = scmp.ne.s32.totalorder %s95, %s96
      %p105 = scmp.eq.s32.totalorder %s22, 0
      %p106 = por %p104, %p105
      %p107 = scmp.ne.s32.totalorder %s95, %s96
      %p108 = scmp.eq.s32.totalorder %s23, 1
      %p109 = por %p107, %p108
      %p111 = scmp.ne.s32.totalorder %s96, %s110
      %p112 = scmp.eq.s32.totalorder %s23, 0
      %p113 = por %p111, %p112
      %s114 = ssub.s32 %s17, %s24
      %p115 = scmp.eq.s32.totalorder %s114, 0
      %s117 = sadd.s32 %s116, 1
      %s118 = scalar_select %p115, %s116, %s117
      %p121 = pneg %p115
      %p122 = scmp.eq.s32.totalorder %s17, 1
      %p123 = por %p121, %p122
      %p124 = scmp.ne.s32.totalorder %s116, %s119
      %p125 = scmp.eq.s32.totalorder %s17, 0
      %p126 = por %p124, %p125
      %p127 = scmp.ne.s32.totalorder %s116, %s119
      %p128 = scmp.eq.s32.totalorder %s22, 1
      %p129 = por %p127, %p128
      %p130 = scmp.ne.s32.totalorder %s119, %s120
      %p131 = scmp.eq.s32.totalorder %s22, 0
      %p132 = por %p130, %p131
      %p133 = scmp.ne.s32.totalorder %s119, %s120
      %p134 = scmp.eq.s32.totalorder %s23, 1
      %p135 = por %p133, %p134
      %p137 = scmp.ne.s32.totalorder %s120, %s136
      %p138 = scmp.eq.s32.totalorder %s23, 0
      %p139 = por %p137, %p138
      %p140 = scmp.le.s32.totalorder 1, %s17
      %p141 = scmp.lt.s32.totalorder %s17, 3
      %p142 = pnand %p140, %p141
      %p143 = pneg %p142
      // Predicated region
      $region9: #{tpu_custom_call.1} parent=5 // pred_check
        _
      $region10: #{tpu_custom_call.1} parent=5 // pred_check_branch
        %145 = sbr.rel (%p142) target = $region12
      $region11: #{tpu_custom_call.1} parent=5 // pred_region
        %s146 = ssub.s32 %s17, 1
        // Predicated region
        $region13: #{tpu_custom_call.1} parent=11 // pred_check
          %p147 = pneg %p64
        $region14: #{tpu_custom_call.1} parent=11 // pred_check_branch
          %149 = sbr.rel (%p147) target = $region16
        $region15: #{tpu_custom_call.1} parent=11 // pred_region
          %s151 = ssub.s32 64, 64
          %152 = vsyncadd [#allocation6], %s151
          %s154 = sshll.u32 [#allocation5], 4
          %s155 = int_to_ptr.vmem [resolvable:$true] %s154
          %157 = dma.hbm_to_vmem [thread:$0]  %s1, 64, %s155, [#allocation6]
        $region16: #{tpu_custom_call.1} parent=11 // pred_fallthru
          _
        // Predicated region
        $region17: #{tpu_custom_call.1} parent=11 // pred_check
          %p158 = pneg %p85
        $region18: #{tpu_custom_call.1} parent=11 // pred_check_branch
          %160 = sbr.rel (%p158) target = $region20
        $region19: #{tpu_custom_call.1} parent=11 // pred_region
          _
        $region20: #{tpu_custom_call.1} parent=11 // pred_fallthru
          _
        // Predicated region
        $region21: #{tpu_custom_call.1} parent=11 // pred_check
          %p161 = pneg %p106
        $region22: #{tpu_custom_call.1} parent=11 // pred_check_branch
          %163 = sbr.rel (%p161) target = $region24
        $region23: #{tpu_custom_call.1} parent=11 // pred_region
          _
        $region24: #{tpu_custom_call.1} parent=11 // pred_fallthru
          _
      $region12: #{tpu_custom_call.1} parent=5 // pred_fallthru
        _
      %p164 = scmp.lt.s32.totalorder %s17, 2
      // Predicated region
      $region25: #{tpu_custom_call.1} parent=5 // pred_check
        %p165 = pneg %p164
      $region26: #{tpu_custom_call.1} parent=5 // pred_check_branch
        %167 = sbr.rel (%p165) target = $region28
      $region27: #{tpu_custom_call.1} parent=5 // pred_region
        // Predicated region
        $region29: #{tpu_custom_call.1} parent=27 // pred_check
          %p168 = pneg %p37
        $region30: #{tpu_custom_call.1} parent=27 // pred_check_branch
          %170 = sbr.rel (%p168) target = $region32
        $region31: #{tpu_custom_call.1} parent=27 // pred_region
          %s171 = sand.u32 %s27, 1
          %s172 = scalar_lea.sflag [#allocation3], %s171
          %s173 = sand.u32 %s27, 1
          %s174 = smul.addr %s173, 8
          %s175 = scalar_lea.vmem [#allocation2], %s174
          %s177 = ssub.s32 128, 128
          %178 = vsyncadd %s172, %s177
          %s179 = smul.addr %s17, 2
          %s180 = smul.addr %s179, 64
          %s181 = scalar_lea.hbm %s0, %s180
          %s183 = sshll.u32 %s175, 4
          %s184 = int_to_ptr.vmem [resolvable:$true] %s183
          %186 = dma.hbm_to_vmem [thread:$0]  %s181, 128, %s184, %s172
        $region32: #{tpu_custom_call.1} parent=27 // pred_fallthru
          _
      $region28: #{tpu_custom_call.1} parent=5 // pred_fallthru
        _
      %p187 = scmp.le.s32.totalorder 1, %s17
      %p188 = scmp.lt.s32.totalorder %s17, 3
      %p189 = pnand %p187, %p188
      %p190 = pneg %p189
      // Predicated region
      $region33: #{tpu_custom_call.1} parent=5 // pred_check
        _
      $region34: #{tpu_custom_call.1} parent=5 // pred_check_branch
        %192 = sbr.rel (%p189) target = $region36
      $region35: #{tpu_custom_call.1} parent=5 // pred_region
        %s193 = ssub.s32 %s17, 1
        %s194 = sand.u32 %s30, 1
        %s195 = scalar_lea.sflag [#allocation3], %s194
        %s196 = sand.u32 %s30, 1
        %s197 = smul.addr %s196, 8
        %s198 = scalar_lea.vmem [#allocation2], %s197
        // Predicated region
        $region37: #{tpu_custom_call.1} parent=35 // pred_check
          %p199 = pneg %p43
        $region38: #{tpu_custom_call.1} parent=35 // pred_check_branch
          %201 = sbr.rel (%p199) target = $region40
        $region39: #{tpu_custom_call.1} parent=35 // pred_region
          %202 = dma.done %s195, 128
        $region40: #{tpu_custom_call.1} parent=35 // pred_fallthru
          _
        // Predicated region
        $region41: #{tpu_custom_call.1} parent=35 // pred_check
          %p203 = pneg %p64
        $region42: #{tpu_custom_call.1} parent=35 // pred_check_branch
          %205 = sbr.rel (%p203) target = $region44
        $region43: #{tpu_custom_call.1} parent=35 // pred_region
          %206 = dma.done [#allocation6], 64
        $region44: #{tpu_custom_call.1} parent=35 // pred_fallthru
          _
        %s207 = sand.u32 %s30, 1
        %s208 = scalar_lea.sflag [#allocation3], %s207
        %s209 = sand.u32 %s30, 1
        %s210 = smul.addr %s209, 8
        %s211 = scalar_lea.vmem [#allocation2], %s210
        %p212 = pneg %p43
        %p213 = pneg %p40
        %p214 = pneg %p64
        %p215 = pneg %p61
        %p216 = pneg %p85
        %p217 = pneg %p82
        %p218 = pneg %p106
        %p219 = pneg %p103
        %p220 = pneg %p132
        %p221 = pneg %p129
        %s222 = sand.u32 %s119, 1
        %s223 = scalar_lea.sflag [#allocation4], %s222
        %s224 = sand.u32 %s119, 1
        %s225 = smul.addr %s224, 8
        %s226 = scalar_lea.vmem [#allocation7], %s225
        %v227 = vld [vmem:[%s198] sm:$0xff]
        %v229 = vcombine.high %v227, %v227
        %231 = vmatprep.subr.mxu0 %v229
        %232 = vmatpush1.xpose.msra.mxu0 %v227
        %233 = vmatprep.subr.mxu0 0.0
        %234 = vmatpush1.xpose.msra.mxu0 0.0
        %235 = vmatprep.subr.mxu0 0.0
        %236 = vmatpush1.xpose.msra.mxu0 0.0
        %237 = vmatprep.subr.mxu0 0.0
        %238 = vmatpush1.xpose.msra.mxu0 0.0
        %239 = vmatprep.subr.mxu0 0.0
        %240 = vmatpush1.xpose.msra.mxu0 0.0
        %241 = vmatprep.subr.mxu0 0.0
        %242 = vmatpush1.xpose.msra.mxu0 0.0
        %243 = vmatprep.subr.mxu0 0.0
        %244 = vmatpush1.xpose.msra.mxu0 0.0
        %245 = vmatprep.subr.mxu0 0.0
        %246 = vmatpush1.xpose.msra.mxu0 0.0
        %247 = vmatprep.subr.mxu0 0.0
        %248 = vmatpush1.xpose.msra.mxu0 0.0
        %249 = vmatprep.subr.mxu0 0.0
        %250 = vmatpush1.xpose.msra.mxu0 0.0
        %251 = vmatprep.subr.mxu0 0.0
        %252 = vmatpush1.xpose.msra.mxu0 0.0
        %253 = vmatprep.subr.mxu0 0.0
        %254 = vmatpush1.xpose.msra.mxu0 0.0
        %255 = vmatprep.subr.mxu0 0.0
        %256 = vmatpush1.xpose.msra.mxu0 0.0
        %257 = vmatprep.subr.mxu0 0.0
        %258 = vmatpush1.xpose.msra.mxu0 0.0
        %259 = vmatprep.subr.mxu0 0.0
        %260 = vmatpush1.xpose.msra.mxu0 0.0
        %261 = vmatprep.subr.mxu0 0.0
        %262 = vmatpush1.xpose.msra.mxu0 0.0
        %263 = vmatprep.subr.mxu0 0.0
        %264 = vmatpush1.xpose.msra.mxu0 0.0
        %265 = vmatprep.subr.mxu0 0.0
        %266 = vmatpush1.xpose.msra.mxu0 0.0
        %267 = vmatprep.subr.mxu0 0.0
        %268 = vmatpush1.xpose.msra.mxu0 0.0
        %269 = vmatprep.subr.mxu0 0.0
        %270 = vmatpush1.xpose.msra.mxu0 0.0
        %271 = vmatprep.subr.mxu0 0.0
        %272 = vmatpush1.xpose.msra.mxu0 0.0
        %273 = vmatprep.subr.mxu0 0.0
        %274 = vmatpush1.xpose.msra.mxu0 0.0
        %275 = vmatprep.subr.mxu0 0.0
        %276 = vmatpush1.xpose.msra.mxu0 0.0
        %277 = vmatprep.subr.mxu0 0.0
        %278 = vmatpush1.xpose.msra.mxu0 0.0
        %279 = vmatprep.subr.mxu0 0.0
        %280 = vmatpush1.xpose.msra.mxu0 0.0
        %281 = vmatprep.subr.mxu0 0.0
        %282 = vmatpush1.xpose.msra.mxu0 0.0
        %283 = vmatprep.subr.mxu0 0.0
        %284 = vmatpush1.xpose.msra.mxu0 0.0
        %285 = vmatprep.subr.mxu0 0.0
        %286 = vmatpush1.xpose.msra.mxu0 0.0
        %287 = vmatprep.subr.mxu0 0.0
        %288 = vmatpush1.xpose.msra.mxu0 0.0
        %289 = vmatprep.subr.mxu0 0.0
        %290 = vmatpush1.xpose.msra.mxu0 0.0
        %291 = vmatprep.subr.mxu0 0.0
        %292 = vmatpush1.xpose.msra.mxu0 0.0
        %293 = vmatprep.subr.mxu0 0.0
        %294 = vmatpush1.xpose.msra.mxu0 0.0
        %295 = vmatprep.mubr.f32.mxu0 %v229
        %296 = vmatmul.mubr.f32.gmra.mrb[0].mxu0 %v227
        %v297 = vpop.f32.mrb[0].mxu0
        %v298 = vadd.f32 0.0, %v297
        %v299 = vpop.f32.mrb[0].mxu0
        %300 = vdwg.mxu0
        %v301 = vld [vmem:[#allocation5] sm:$0x7]
        %v302 = vld [vmem:[%s2] sm:$0xf]
        %v303 = vld [vmem:[%s3] sm:$0xf]
        %v304 = vlaneseq
        %v305 = vshrl.u32 %v304, 7
        %v306 = vlaneseq
        %v307 = vand.u32 %v306, 127
        %vm308 = vcmp.eq.s32.totalorder %v305, %v307
        %v309 = vsel %vm308, %v298, 0.0
        %vm310 = vcmask 27648
        %v311 = vsel %vm310, %v309, 0.0
        %312 = vadd.xlane.f32.xlu0 %v311
        %v313 = vpop.xlane.xlu0 %312
        %v314 = vrsqrt.pop %v313
        %v315 = vmul.f32 %v313, %v314
        %vm316 = vcmp.eq.f32.partialorder %v313, inf
        %v317 = vsel %vm316, %v313, %v315
        %vm318 = vcmp.eq.f32.partialorder %v313, 0.0
        %v319 = vand.u32 %v313, 2147483648
        %v320 = vsel %vm318, %v319, %v317
        %v321 = vrot.slane %v311, 4
        %v322 = vadd.f32 %v311, %v321
        %v323 = vrot.slane %v322, 2
        %v324 = vadd.f32 %v322, %v323
        %v325 = vrot.slane %v324, 1
        %v326 = vadd.f32 %v324, %v325
        %v327 = vrsqrt.pop %v326
        %v328 = vmul.f32 %v326, %v327
        %vm329 = vcmp.eq.f32.partialorder %v326, inf
        %v330 = vsel %vm329, %v326, %v328
        %vm331 = vcmp.eq.f32.partialorder %v326, 0.0
        %v332 = vand.u32 %v326, 2147483648
        %v333 = vsel %vm331, %v332, %v330
        %v334 = vand.u32 2147483647, %v302
        %v335 = vmul.f32 %v334, %v320
        %v336 = vmax.f32 %v335, 1e-12
        %v337 = vand.u32 2147483647, %v301
        %v338 = vmul.f32 %v337, %v333
        %v339 = vmax.f32 %v338, 1e-12
        %341 = vset.pattern.permute.xlu0 0
        %342 = vperm.xlu0 %341, %v302
        %v343 = vpop.permute.xlu0 %342
        %v345 = vlaneseq
        %v346 = vshrl.u32 %v345, 7
        %v347 = vsub.s32 1, %v346
        %v348 = vrot.slane %v301, %v347
        %v349 = vmul.f32 %v343, %v348
        %351 = vset.pattern.permute.xlu0 0
        %352 = vperm.xlu0 %351, %v336
        %v353 = vpop.permute.xlu0 %352
        %v355 = vlaneseq
        %v356 = vshrl.u32 %v355, 7
        %v357 = vsub.s32 1, %v356
        %v358 = vrot.slane %v339, %v357
        %v359 = vmul.f32 %v353, %v358
        %v360 = vrcp.pop %v359
        %v361 = vmul.f32 %v349, %v360
        %v362 = vmul.f32 %v298, %v361
        %v363 = vsel %vm310, %v362, -inf
        %364 = vmax.xlane.f32.xlu0 %v363
        %v365 = vpop.xlane.xlu0 %364
        %v366 = vsub.f32 %v362, %v365
        %v367 = vmul.f32 %v366, 1.442695
        %v368 = vpow.pop %v367
        %v369 = vsel %vm310, %v368, 0.0
        %370 = vadd.xlane.f32.xlu0 %v369
        %v371 = vpop.xlane.xlu0 %370
        %v372 = vrcp.pop %v371
        %v373 = vmul.f32 %v368, %v372
        %v374 = vlaneseq
        %v375 = vshrl.u32 %v374, 7
        %v376 = vsub.s32 2, %v375
        %v377 = vrot.slane %v301, %v376
        %v378 = vmul.f32 %v373, %v377
        %vm379 = vcmask 31744
        %v381 = vsel %vm379, %v303, 0
        %vm383 = vcmask 1043456
        %v385 = vsel %vm383, %v378, 0
        %387 = vmatprep.subr.mxu0 0.0
        %388 = vmatpush1.msra.mxu0 %v385
        %389 = vmatprep.subr.mxu0 0.0
        %390 = vmatpush1.msra.mxu0 0.0
        %391 = vmatprep.subr.mxu0 0.0
        %392 = vmatpush1.msra.mxu0 0.0
        %393 = vmatprep.subr.mxu0 0.0
        %394 = vmatpush1.msra.mxu0 0.0
        %395 = vmatprep.subr.mxu0 0.0
        %396 = vmatpush1.msra.mxu0 0.0
        %397 = vmatprep.subr.mxu0 0.0
        %398 = vmatpush1.msra.mxu0 0.0
        %399 = vmatprep.subr.mxu0 0.0
        %400 = vmatpush1.msra.mxu0 0.0
        %401 = vmatprep.subr.mxu0 0.0
        %402 = vmatpush1.msra.mxu0 0.0
        %403 = vmatprep.subr.mxu0 0.0
        %404 = vmatpush1.msra.mxu0 0.0
        %405 = vmatprep.subr.mxu0 0.0
        %406 = vmatpush1.msra.mxu0 0.0
        %407 = vmatprep.subr.mxu0 0.0
        %408 = vmatpush1.msra.mxu0 0.0
        %409 = vmatprep.subr.mxu0 0.0
        %410 = vmatpush1.msra.mxu0 0.0
        %411 = vmatprep.subr.mxu0 0.0
        %412 = vmatpush1.msra.mxu0 0.0
        %413 = vmatprep.subr.mxu0 0.0
        %414 = vmatpush1.msra.mxu0 0.0
        %415 = vmatprep.subr.mxu0 0.0
        %416 = vmatpush1.msra.mxu0 0.0
        %417 = vmatprep.subr.mxu0 0.0
        %418 = vmatpush1.msra.mxu0 0.0
        %419 = vmatprep.subr.mxu0 0.0
        %420 = vmatpush1.msra.mxu0 0.0
        %421 = vmatprep.subr.mxu0 0.0
        %422 = vmatpush1.msra.mxu0 0.0
        %423 = vmatprep.subr.mxu0 0.0
        %424 = vmatpush1.msra.mxu0 0.0
        %425 = vmatprep.subr.mxu0 0.0
        %426 = vmatpush1.msra.mxu0 0.0
        %427 = vmatprep.subr.mxu0 0.0
        %428 = vmatpush1.msra.mxu0 0.0
        %429 = vmatprep.subr.mxu0 0.0
        %430 = vmatpush1.msra.mxu0 0.0
        %431 = vmatprep.subr.mxu0 0.0
        %432 = vmatpush1.msra.mxu0 0.0
        %433 = vmatprep.subr.mxu0 0.0
        %434 = vmatpush1.msra.mxu0 0.0
        %435 = vmatprep.subr.mxu0 0.0
        %436 = vmatpush1.msra.mxu0 0.0
        %437 = vmatprep.subr.mxu0 0.0
        %438 = vmatpush1.msra.mxu0 0.0
        %439 = vmatprep.subr.mxu0 0.0
        %440 = vmatpush1.msra.mxu0 0.0
        %441 = vmatprep.subr.mxu0 0.0
        %442 = vmatpush1.msra.mxu0 0.0
        %443 = vmatprep.subr.mxu0 0.0
        %444 = vmatpush1.msra.mxu0 0.0
        %445 = vmatprep.subr.mxu0 0.0
        %446 = vmatpush1.msra.mxu0 0.0
        %447 = vmatprep.subr.mxu0 0.0
        %448 = vmatpush1.msra.mxu0 0.0
        %449 = vmatprep.subr.mxu0 0.0
        %450 = vmatpush1.msra.mxu0 0.0
        %451 = vmatprep.mubr.f32.mxu0 0.0
        %452 = vmatmul.mubr.f32.gmra.mrb[0].mxu0 %v381
        %v453 = vpop.f32.mrb[0].mxu0
        %v454 = vadd.f32 0.0, %v453
        %v455 = vpop.f32.mrb[0].mxu0
        %456 = vdwg.mxu0
        %v458 = vsel %vm379, %v454, 0
        %v460 = vsel %vm383, %v227, 0
        %v462 = vsel %vm383, %v229, 0
        %464 = vmatprep.subr.mxu0 %v462
        %465 = vmatpush1.msra.mxu0 %v460
        %466 = vmatprep.subr.mxu0 0.0
        %467 = vmatpush1.msra.mxu0 0.0
        %468 = vmatprep.subr.mxu0 0.0
        %469 = vmatpush1.msra.mxu0 0.0
        %470 = vmatprep.subr.mxu0 0.0
        %471 = vmatpush1.msra.mxu0 0.0
        %472 = vmatprep.subr.mxu0 0.0
        %473 = vmatpush1.msra.mxu0 0.0
        %474 = vmatprep.subr.mxu0 0.0
        %475 = vmatpush1.msra.mxu0 0.0
        %476 = vmatprep.subr.mxu0 0.0
        %477 = vmatpush1.msra.mxu0 0.0
        %478 = vmatprep.subr.mxu0 0.0
        %479 = vmatpush1.msra.mxu0 0.0
        %480 = vmatprep.subr.mxu0 0.0
        %481 = vmatpush1.msra.mxu0 0.0
        %482 = vmatprep.subr.mxu0 0.0
        %483 = vmatpush1.msra.mxu0 0.0
        %484 = vmatprep.subr.mxu0 0.0
        %485 = vmatpush1.msra.mxu0 0.0
        %486 = vmatprep.subr.mxu0 0.0
        %487 = vmatpush1.msra.mxu0 0.0
        %488 = vmatprep.subr.mxu0 0.0
        %489 = vmatpush1.msra.mxu0 0.0
        %490 = vmatprep.subr.mxu0 0.0
        %491 = vmatpush1.msra.mxu0 0.0
        %492 = vmatprep.subr.mxu0 0.0
        %493 = vmatpush1.msra.mxu0 0.0
        %494 = vmatprep.subr.mxu0 0.0
        %495 = vmatpush1.msra.mxu0 0.0
        %496 = vmatprep.subr.mxu0 0.0
        %497 = vmatpush1.msra.mxu0 0.0
        %498 = vmatprep.subr.mxu0 0.0
        %499 = vmatpush1.msra.mxu0 0.0
        %500 = vmatprep.subr.mxu0 0.0
        %501 = vmatpush1.msra.mxu0 0.0
        %502 = vmatprep.subr.mxu0 0.0
        %503 = vmatpush1.msra.mxu0 0.0
        %504 = vmatprep.subr.mxu0 0.0
        %505 = vmatpush1.msra.mxu0 0.0
        %506 = vmatprep.subr.mxu0 0.0
        %507 = vmatpush1.msra.mxu0 0.0
        %508 = vmatprep.subr.mxu0 0.0
        %509 = vmatpush1.msra.mxu0 0.0
        %510 = vmatprep.subr.mxu0 0.0
        %511 = vmatpush1.msra.mxu0 0.0
        %512 = vmatprep.subr.mxu0 0.0
        %513 = vmatpush1.msra.mxu0 0.0
        %514 = vmatprep.subr.mxu0 0.0
        %515 = vmatpush1.msra.mxu0 0.0
        %516 = vmatprep.subr.mxu0 0.0
        %517 = vmatpush1.msra.mxu0 0.0
        %518 = vmatprep.subr.mxu0 0.0
        %519 = vmatpush1.msra.mxu0 0.0
        %520 = vmatprep.subr.mxu0 0.0
        %521 = vmatpush1.msra.mxu0 0.0
        %522 = vmatprep.subr.mxu0 0.0
        %523 = vmatpush1.msra.mxu0 0.0
        %524 = vmatprep.subr.mxu0 0.0
        %525 = vmatpush1.msra.mxu0 0.0
        %526 = vmatprep.subr.mxu0 0.0
        %527 = vmatpush1.msra.mxu0 0.0
        %528 = vmatprep.mubr.f32.mxu0 0.0
        %529 = vmatmul.mubr.f32.gmra.mrb[0].mxu0 %v458
        %v530 = vpop.f32.mrb[0].mxu0
        %v531 = vadd.f32 0.0, %v530
        %v532 = vpop.f32.mrb[0].mxu0
        %v533 = vadd.f32 0.0, %v532
        %534 = vdwg.mxu0
        %v537 = vcombine.low %v531, %v533
        %539 = vst [vmem:[%s226] sm:$0xff] %v537
        %s540 = sand.u32 %s119, 1
        %s541 = scalar_lea.sflag [#allocation4], %s540
        %s542 = sand.u32 %s119, 1
        %s543 = smul.addr %s542, 8
        %s544 = scalar_lea.vmem [#allocation7], %s543
        // Predicated region
        $region45: #{tpu_custom_call.1} parent=35 // pred_check
          %p545 = pneg %p129
        $region46: #{tpu_custom_call.1} parent=35 // pred_check_branch
          %547 = sbr.rel (%p545) target = $region48
        $region47: #{tpu_custom_call.1} parent=35 // pred_region
          %s549 = ssub.s32 128, 128
          %550 = vsyncadd %s541, %s549
          %s551 = smul.addr %s22, 2
          %s552 = smul.addr %s551, 64
          %s553 = scalar_lea.hbm %s4, %s552
          %s555 = sshll.u32 %s544, 4
          %s556 = int_to_ptr.vmem [resolvable:$true] %s555
          %558 = dma.vmem_to_hbm [thread:$0]  %s556, 128, %s553, %s541
        $region48: #{tpu_custom_call.1} parent=35 // pred_fallthru
          _
      $region36: #{tpu_custom_call.1} parent=5 // pred_fallthru
        _
      %p559 = scmp.le.s32.totalorder 2, %s17
      // Predicated region
      $region49: #{tpu_custom_call.1} parent=5 // pred_check
        %p560 = pneg %p559
      $region50: #{tpu_custom_call.1} parent=5 // pred_check_branch
        %562 = sbr.rel (%p560) target = $region52
      $region51: #{tpu_custom_call.1} parent=5 // pred_region
        %s563 = ssub.s32 %s17, 2
        // Predicated region
        $region53: #{tpu_custom_call.1} parent=51 // pred_check
          %p564 = pneg %p135
        $region54: #{tpu_custom_call.1} parent=51 // pred_check_branch
          %566 = sbr.rel (%p564) target = $region56
        $region55: #{tpu_custom_call.1} parent=51 // pred_region
          %s567 = sand.u32 %s120, 1
          %s568 = scalar_lea.sflag [#allocation4], %s567
          %s569 = sand.u32 %s120, 1
          %s570 = smul.addr %s569, 8
          %s571 = scalar_lea.vmem [#allocation7], %s570
          %572 = dma.done %s568, 128
        $region56: #{tpu_custom_call.1} parent=51 // pred_fallthru
          _
      $region52: #{tpu_custom_call.1} parent=5 // pred_fallthru
        _
    $region6: #{tpu_custom_call.1} parent=1 // loop_footer
      %s21 = sadd.s32 1, %s17
    $region7: #{tpu_custom_call.1} parent=1 // loop_footer_branch
      %16 = sbr.rel target = $region3
    $region8: #{tpu_custom_call.1} parent=1 // loop_exit
      _
    %573 = vsyncpa [#allocation3], 1
    %s574 = scalar_lea.sflag [#allocation3], 1
    %575 = vsyncpa %s574, 1
    %576 = vsyncpa [#allocation6], 1
    %577 = vsyncpa [#allocation4], 1
    %s578 = scalar_lea.sflag [#allocation4], 1
    %579 = vsyncpa %s578, 1

</llo_original>
